<compile_context>
chip_gen: v6e
topology: v6e:2x2x1
jax: 0.10.0
libtpu: 0.0.40
codegen_flags: <defaults>
</compile_context>

<pallas_src>
import functools
import numpy as np
import jax
import jax.numpy as jnp
from jax.experimental import pallas as pl
from jax.experimental.pallas import tpu as pltpu

# ---------------- hyper-parameters (small, consistent with the module) -------
HIDDEN_DIM = 32        # params.hidden_dim
ATTN_DIM   = 16        # params.attn_dim
N_REL      = 4         # params.n_rel
N_LAYER    = 2         # params.n_layer
N_ENT      = 50        # loader.n_ent
EMBED_DIM  = 64        # RatingModel embed_dim (hardcoded in RED_GNN.__init__)
RATING_IN  = 2 * EMBED_DIM   # 128 (hardcoded input_dim)
RATING_HID = 256             # hardcoded hidden_dim of RatingModel

# Tile sizes.  Small here for the demo graph; for real graphs push E_BLK to
# 1024-4096 and N_TILE to 256 while keeping (msg tile + one-hot + accumulator,
# double-buffered) well under the per-core VMEM budget.
E_BLK  = 256           # edge rows per grid step (lane axis of the one-hot)
N_TILE = 128           # node rows per output tile

VMEM_SPEC = pl.BlockSpec(memory_space=pltpu.MemorySpace.VMEM)


# ---------------- Pallas kernels ---------------------------------------------
def rating_mlp_kernel(x_ref, w1_ref, b1_ref, w2_ref, b2_ref, w3_ref, b3_ref, o_ref):
    # x / weights are bf16, accumulation + nonlinearities in f32.
    x = x_ref[...]
    h = jnp.dot(x, w1_ref[...], preferred_element_type=jnp.float32) + b1_ref[...]
    h = jnp.maximum(h, 0.0)
    # TODO(synk): nn.Dropout(p=0.5) layers run in eval mode here (identity).
    h = jnp.dot(h.astype(jnp.bfloat16), w2_ref[...],
                preferred_element_type=jnp.float32) + b2_ref[...]
    h = jnp.maximum(h, 0.0)
    o_ref[...] = jnp.dot(h.astype(jnp.bfloat16), w3_ref[...],
                         preferred_element_type=jnp.float32) + b3_ref[...]


def edge_message_kernel(x_ref, wcat_ref, bqr_ref, wa_ref, ba_ref, msg_ref):
    """Per-edge attention + message.  grid = (edge_blocks,).

    x_ref   : (E_BLK, 3D) bf16  = [hs | hr | hqr] per edge
    msg_ref : (E_BLK, D)  bf16  = alpha * (hs + hr)
    """
    D = HIDDEN_DIM
    x = x_ref[...]                                              # (E_BLK, 3D) bf16

    # attention: single fused matmul, K = 3D = 96
    pre = jnp.dot(x, wcat_ref[...],
                  preferred_element_type=jnp.float32) + bqr_ref[...]   # (E_BLK, A)
    pre = jnp.maximum(pre, 0.0)                                        # ReLU
    # alpha on the VPU/XLU (lane multiply + 16-lane reduce) instead of an
    # N=1 MXU pass.
    alpha = jax.nn.sigmoid(
        jnp.sum(pre * wa_ref[...], axis=-1, keepdims=True) + ba_ref[...])  # (E_BLK,1)

    hs = x[:, :D].astype(jnp.float32)
    hr = x[:, D:2 * D].astype(jnp.float32)
    msg_ref[...] = (alpha * (hs + hr)).astype(jnp.bfloat16)             # (E_BLK, D)


def scatter_gru_kernel(want_score,
                       blk_min_ref, blk_max_ref,            # scalar prefetch (SMEM)
                       msg_ref, obj_ref, h0_ref,
                       wh_ref, gwx_ref, gwh_ref, gbx_ref, gbh_ref, wf_ref,
                       *outs):
    """Tiled scatter-add + W_h + single-step GRU (+ optional W_final).

    grid = (node_tiles j [parallel], edge_blocks k [arbitrary]).
    msg_ref : (E_BLK, D) bf16   per-edge message
    obj_ref : (1, E_BLK) int32  destination node index per edge (-1 = padding)
    h0_ref  : (N_TILE, D) f32   previous GRU state (expanded to new node set)
    acc_ref : (N_TILE, D) f32   scatter-add accumulator (VMEM scratch)
    """
    D = HIDDEN_DIM
    if want_score:
        hid_ref, score_ref, acc_ref = outs
    else:
        hid_ref, acc_ref = outs
        score_ref = None

    j = pl.program_id(0)
    k = pl.program_id(1)

    @pl.when(k == 0)
    def _():
        acc_ref[...] = jnp.zeros_like(acc_ref)

    # Skip edge blocks whose destination-node range cannot touch this node
    # tile (per-block min/max obj prefetched to SMEM).  Saves VPU + MXU work;
    # the DMA of the block still happens (static index map).
    tile_lo = j * N_TILE
    overlaps = jnp.logical_and(blk_max_ref[k] >= tile_lo,
                               blk_min_ref[k] < tile_lo + N_TILE)

    @pl.when(overlaps)
    def _():
        # tiled scatter-add over obj: one-hot only for this node tile
        node_ids = jax.lax.broadcasted_iota(jnp.int32, (N_TILE, E_BLK), 0) + tile_lo
        onehot = (node_ids == obj_ref[...]).astype(jnp.bfloat16)        # (N_TILE,E_BLK)
        acc_ref[...] += jnp.dot(onehot, msg_ref[...],
                                preferred_element_type=jnp.float32)     # (N_TILE, D)

    # finalize on the last edge block: W_h, GRU, (W_final)
    @pl.when(k == pl.num_programs(1) - 1)
    def _():
        agg = acc_ref[...]
        hidden_new = jnp.dot(agg.astype(jnp.bfloat16), wh_ref[...],
                             preferred_element_type=jnp.float32)
        hidden_new = jnp.maximum(hidden_new, 0.0)                      # act = ReLU
        # TODO(synk): self.dropout(hidden) modeled with params.dropout = 0.

        # single-step GRU, gates fused: 2 matmuls with N = 3D = 96.
        h0 = h0_ref[...]
        gi = jnp.dot(hidden_new.astype(jnp.bfloat16), gwx_ref[...],
                     preferred_element_type=jnp.float32) + gbx_ref[...]
        gh = jnp.dot(h0.astype(jnp.bfloat16), gwh_ref[...],
                     preferred_element_type=jnp.float32) + gbh_ref[...]
        r = jax.nn.sigmoid(gi[:, :D] + gh[:, :D])
        z = jax.nn.sigmoid(gi[:, D:2 * D] + gh[:, D:2 * D])
        nlin = jnp.tanh(gi[:, 2 * D:] + r * gh[:, 2 * D:])
        h_new = (1.0 - z) * nlin + z * h0

        hid_ref[...] = h_new
        if want_score:
            # W_final as a lane reduction; lane-dense (128-wide) output slab to
            # avoid masked vst on a last-dim-1 output.  Wrapper slices lane 0.
            score = jnp.sum(h_new * wf_ref[...], axis=-1, keepdims=True)
            score_ref[...] = jnp.broadcast_to(score, score_ref.shape)


# ---------------- wrappers ----------------------------------------------------
def rating_mlp(x, rp):
    n = x.shape[0]
    n_pad = ((n + 7) // 8) * 8
    x_p = jnp.zeros((n_pad, RATING_IN), jnp.bfloat16).at[:n].set(x.astype(jnp.bfloat16))
    out = pl.pallas_call(
        rating_mlp_kernel,
        out_shape=jax.ShapeDtypeStruct((n_pad, RATING_HID), jnp.float32),
        in_specs=[VMEM_SPEC] * 7,
        out_specs=VMEM_SPEC,
    )(x_p, rp['w1'], rp['b1'], rp['w2'], rp['b2'], rp['w3'], rp['b3'])
    return out[:n]


def edge_messages(x_pad, lw, e_pad):
    D = HIDDEN_DIM
    K = e_pad // E_BLK
    grid_spec = pltpu.PrefetchScalarGridSpec(
        num_scalar_prefetch=0,
        grid=(K,),
        in_specs=[
            pl.BlockSpec((E_BLK, 3 * D), lambda k: (k, 0)),        # x = [hs|hr|hqr]
            pl.BlockSpec((3 * D, ATTN_DIM), lambda k: (0, 0)),     # Wcat
            pl.BlockSpec((1, ATTN_DIM), lambda k: (0, 0)),         # bqr
            pl.BlockSpec((1, ATTN_DIM), lambda k: (0, 0)),         # wa row
            pl.BlockSpec((1, 1), lambda k: (0, 0)),                # ba
        ],
        out_specs=pl.BlockSpec((E_BLK, D), lambda k: (k, 0)),
    )
    return pl.pallas_call(
        edge_message_kernel,
        out_shape=jax.ShapeDtypeStruct((e_pad, D), jnp.bfloat16),
        grid_spec=grid_spec,
        compiler_params=pltpu.CompilerParams(dimension_semantics=("parallel",)),
    )(x_pad, lw['wcat'], lw['bqr'], lw['wa_row'], lw['ba'])


def scatter_gru_layer(msg_pad, obj_pad, h0_pad, blk_min, blk_max, lw,
                      n_pad, e_pad, want_score):
    D = HIDDEN_DIM
    J = n_pad // N_TILE
    K = e_pad // E_BLK

    in_specs = [
        pl.BlockSpec((E_BLK, D), lambda j, k, *_: (k, 0)),        # message
        pl.BlockSpec((1, E_BLK), lambda j, k, *_: (0, k)),        # obj (lane-major)
        pl.BlockSpec((N_TILE, D), lambda j, k, *_: (j, 0)),       # h0
        pl.BlockSpec((D, D), lambda j, k, *_: (0, 0)),            # W_h
        pl.BlockSpec((D, 3 * D), lambda j, k, *_: (0, 0)),        # GRU Wx
        pl.BlockSpec((D, 3 * D), lambda j, k, *_: (0, 0)),        # GRU Wh
        pl.BlockSpec((1, 3 * D), lambda j, k, *_: (0, 0)),        # GRU bx
        pl.BlockSpec((1, 3 * D), lambda j, k, *_: (0, 0)),        # GRU bh
        pl.BlockSpec((1, D), lambda j, k, *_: (0, 0)),            # w_final row
    ]
    hid_spec = pl.BlockSpec((N_TILE, D), lambda j, k, *_: (j, 0))
    if want_score:
        out_specs = [hid_spec, pl.BlockSpec((N_TILE, 128), lambda j, k, *_: (j, 0))]
        out_shape = (jax.ShapeDtypeStruct((n_pad, D), jnp.float32),
                     jax.ShapeDtypeStruct((n_pad, 128), jnp.float32))
    else:
        out_specs = [hid_spec]
        out_shape = (jax.ShapeDtypeStruct((n_pad, D), jnp.float32),)

    grid_spec = pltpu.PrefetchScalarGridSpec(
        num_scalar_prefetch=2,                                    # blk_min, blk_max
        grid=(J, K),
        in_specs=in_specs,
        out_specs=out_specs,
        scratch_shapes=[pltpu.VMEM((N_TILE, D), jnp.float32)],
    )
    outs = pl.pallas_call(
        functools.partial(scatter_gru_kernel, want_score),
        out_shape=out_shape,
        grid_spec=grid_spec,
        compiler_params=pltpu.CompilerParams(
            # node tiles independent -> shard across TCs; edge axis is the
            # scatter-add reduction.
            dimension_semantics=("parallel", "arbitrary")),
    )(blk_min, blk_max, msg_pad, obj_pad, h0_pad,
      lw['Wh'], lw['gwx'], lw['gwh'], lw['gbx'], lw['gbh'], lw['wf_row'])

    if want_score:
        hid_pad, score_pad = outs
        return hid_pad, score_pad
    (hid_pad,) = outs
    return hid_pad, None


# ---------------- synthetic loader (host-side graph expansion) ----------------
class SyntheticLoader:
    """Deterministic stand-in for loader.get_neighbors_withoutmatrix."""
    # TODO(synk): the real loader walks a KG adjacency structure on the host;
    # here a deterministic synthetic expansion produces edges in the same
    # column layout: [batch_idx, head_ent, rel, tail_ent, head_old_idx, tail_new_idx].

    def __init__(self, n_ent, n_rel, k_neighbors=3):
        self.n_ent = n_ent
        self.n_rel = n_rel
        self.k = k_neighbors

    def get_neighbors_withoutmatrix(self, nodes, mode='train'):
        n_old = nodes.shape[0]
        node_list = [tuple(r) for r in nodes.tolist()]
        node_idx = {t: i for i, t in enumerate(node_list)}
        edges = []
        for i in range(n_old):                      # expand only the frontier nodes
            b, e = node_list[i]
            for k in range(self.k):
                rel = (e * 3 + k) % (2 * self.n_rel + 1)
                tgt = (e * 7 + 13 * k + b + 1) % self.n_ent
                key = (b, tgt)
                if key not in node_idx:
                    node_idx[key] = len(node_list)
                    node_list.append(key)
                edges.append([b, e, rel, tgt, i, node_idx[key]])
        new_nodes = np.array(node_list, dtype=np.int64)
        edges = np.array(edges, dtype=np.int64)
        old_nodes_new_idx = np.arange(n_old, dtype=np.int64)  # old nodes kept as prefix
        return new_nodes, edges, old_nodes_new_idx


# ---------------- parameter init (deterministic, PyTorch-like layout) ----------
def init_params(key):
    ks = jax.random.split(key, 32)

    def rnd(k, shape, scale=0.1):
        return jax.random.normal(k, shape, dtype=jnp.float32) * scale

    p = {}
    # RatingModel
    p['ent_emb'] = rnd(ks[0], (N_ENT, EMBED_DIM))
    p['r_w1'] = rnd(ks[1], (RATING_IN, RATING_HID));  p['r_b1'] = rnd(ks[2], (1, RATING_HID))
    p['r_w2'] = rnd(ks[3], (RATING_HID, RATING_HID)); p['r_b2'] = rnd(ks[4], (1, RATING_HID))
    p['r_w3'] = rnd(ks[5], (RATING_HID, RATING_HID)); p['r_b3'] = rnd(ks[6], (1, RATING_HID))

    # GNN layers
    p['gnn'] = []
    for i in range(N_LAYER):
        kk = jax.random.split(ks[7 + i], 8)
        p['gnn'].append(dict(
            rela_embed=rnd(kk[0], (2 * N_REL + 1, HIDDEN_DIM)),
            Ws=rnd(kk[1], (HIDDEN_DIM, ATTN_DIM)),
            Wr=rnd(kk[2], (HIDDEN_DIM, ATTN_DIM)),
            Wqr=rnd(kk[3], (HIDDEN_DIM, ATTN_DIM)),
            bqr=rnd(kk[4], (1, ATTN_DIM)),
            wa=rnd(kk[5], (ATTN_DIM, 1)),
            ba=rnd(kk[6], (1, 1)),
            Wh=rnd(kk[7], (HIDDEN_DIM, HIDDEN_DIM)),
        ))

    # GRU gate: PyTorch layout weight_ih (3D, D) with row blocks [r, z, n]
    D = HIDDEN_DIM
    p['gru_w_ih'] = rnd(ks[20], (3 * D, D))
    p['gru_w_hh'] = rnd(ks[21], (3 * D, D))
    p['gru_b_ih'] = rnd(ks[22], (3 * D,))
    p['gru_b_hh'] = rnd(ks[23], (3 * D,))
    p['w_final'] = rnd(ks[24], (HIDDEN_DIM, 1))
    return p


def prepare_kernel_params(p):
    """Pre-fuse / pre-transpose / bf16-cast weights into kernel layout."""
    bf = lambda a: a.astype(jnp.bfloat16)

    kp = {'rating': dict(w1=bf(p['r_w1']), b1=p['r_b1'],
                         w2=bf(p['r_w2']), b2=p['r_b2'],
                         w3=bf(p['r_w3']), b3=p['r_b3'])}

    # fused GRU gate weights: gi = x @ W_ih^T (+b_ih), gh = h @ W_hh^T (+b_hh);
    # column blocks of the 3D output are [r | z | n] (PyTorch order).
    gwx = bf(p['gru_w_ih'].T)             # (D, 3D)
    gwh = bf(p['gru_w_hh'].T)             # (D, 3D)
    gbx = p['gru_b_ih'][None, :]          # (1, 3D) f32
    gbh = p['gru_b_hh'][None, :]          # (1, 3D) f32
    wf_row = p['w_final'].T               # (1, D)  f32

    layers = []
    for lp in p['gnn']:
        layers.append(dict(
            rela_embed=lp['rela_embed'],
            # pre = [hs|hr|hqr] @ [Ws; Wr; Wqr]  (single K=96 matmul)
            wcat=bf(jnp.concatenate([lp['Ws'], lp['Wr'], lp['Wqr']], axis=0)),
            bqr=lp['bqr'],
            wa_row=lp['wa'].T,            # (1, ATTN_DIM)
            ba=lp['ba'],
            Wh=bf(lp['Wh']),
            gwx=gwx, gwh=gwh, gbx=gbx, gbh=gbh, wf_row=wf_row))
    kp['layers'] = layers
    return kp


# ---------------- RED_GNN forward ----------------------------------------------
def red_gnn_forward(params, kparams, loader, triples_np, neg_objs_np, mode='train'):
    subs = triples_np[:, 0]
    rels = triples_np[:, 1]
    objs = triples_np[:, 2]
    n = len(subs)
    D = HIDDEN_DIM

    # RatingModel on (user=sub, item=obj)
    if mode == 'train':
        ue = params['ent_emb'][jnp.asarray(subs)]
        ie = params['ent_emb'][jnp.asarray(objs)]
        pred_rating = rating_mlp(jnp.concatenate([ue, ie], axis=1), kparams['rating'])
    else:
        pred_rating = None

    q_rel = jnp.asarray(rels)
    h0 = jnp.zeros((n, D), jnp.float32)
    nodes = np.stack([np.arange(n, dtype=np.int64), subs.astype(np.int64)], axis=1)
    hidden = jnp.zeros((n, D), jnp.float32)
    score_slab = None
    n_node = n

    for i in range(N_LAYER):
        nodes, edges, old_idx = loader.get_neighbors_withoutmatrix(nodes, mode=mode)
        n_node = nodes.shape[0]
        lp = params['gnn'][i]
        lw = kparams['layers'][i]

        sub = jnp.asarray(edges[:, 4]).astype(jnp.int32)
        rel = jnp.asarray(edges[:, 2]).astype(jnp.int32)
        obj_np = edges[:, 5].astype(np.int32)
        r_idx = jnp.asarray(edges[:, 0]).astype(jnp.int32)

        # TODO(synk): these row gathers stay in XLA; moving them in-kernel needs
        # PrefetchScalarGridSpec + pl.Element row-gather BlockSpecs.
        hs = hidden[sub]                                 # (E, D)
        hr = lp['rela_embed'][rel]                       # (E, D)
        hqr = lp['rela_embed'][q_rel][r_idx]             # (E, D)
        x_cat = jnp.concatenate([hs, hr, hqr], axis=1)   # (E, 3D)

        E = edges.shape[0]
        e_pad = ((E + E_BLK - 1) // E_BLK) * E_BLK
        n_pad = ((n_node + N_TILE - 1) // N_TILE) * N_TILE
        K = e_pad // E_BLK

        x_pad = jnp.zeros((e_pad, 3 * D), jnp.bfloat16).at[:E].set(
            x_cat.astype(jnp.bfloat16))

        # obj with -1 padding (matches no node id), plus per-edge-block
        # [min, max] destination ranges for the scatter block-skip.
        obj_full = np.full((e_pad,), -1, np.int32)
        obj_full[:E] = obj_np
        obj_pad = jnp.asarray(obj_full)[None, :]         # (1, e_pad)
        obj_blocks = obj_full.reshape(K, E_BLK)
        blk_max = jnp.asarray(obj_blocks.max(axis=1).astype(np.int32))
        blk_min = jnp.asarray(np.where(obj_blocks >= 0, obj_blocks,
                                       np.iinfo(np.int32).max)
                              .min(axis=1).astype(np.int32))

        # expand h0 to the new node set (index_copy_ along node axis) + pad
        h0_pad = jnp.zeros((n_pad, D), jnp.float32).at[jnp.asarray(old_idx)].set(h0)

        # 1) per-edge attention + message (single pass over edges)
        msg_pad = edge_messages(x_pad, lw, e_pad)
        # 2) tiled scatter-add + W_h + GRU (+ W_final on the last layer)
        want_score = (i == N_LAYER - 1)
        hid_pad, score_pad = scatter_gru_layer(msg_pad, obj_pad, h0_pad,
                                               blk_min, blk_max, lw,
                                               n_pad, e_pad, want_score)
        hidden = hid_pad[:n_node]          # GRU output == new h0 for next layer
        h0 = hidden
        if want_score:
            score_slab = score_pad

    scores = score_slab[:n_node, 0]                      # (n_node,)
    scores_all = jnp.zeros((n, loader.n_ent), jnp.float32).at[
        jnp.asarray(nodes[:, 0]), jnp.asarray(nodes[:, 1])].set(scores)

    if mode == 'train':
        pos = scores_all[jnp.arange(n), jnp.asarray(objs)]
        neg = scores_all[jnp.arange(n)[:, None], jnp.asarray(neg_objs_np)]
        result_scores = jnp.concatenate([pos[:, None], neg], axis=1)
        return result_scores, pred_rating
    return scores_all


# ---------------- main ----------------------------------------------------------
if __name__ == "__main__":
    params = init_params(jax.random.PRNGKey(0))
    kparams = prepare_kernel_params(params)
    loader = SyntheticLoader(N_ENT, N_REL, k_neighbors=3)

    rng = np.random.RandomState(0)
    n = 4
    triples = np.stack([rng.randint(0, N_ENT, size=n),
                        rng.randint(0, N_REL, size=n),
                        rng.randint(0, N_ENT, size=n)], axis=1).astype(np.int64)
    neg_objs = rng.randint(0, N_ENT, size=(n, 3)).astype(np.int64)

    result_scores, pred_rating = red_gnn_forward(params, kparams, loader,
                                                 triples, neg_objs, mode='train')
    jax.block_until_ready((result_scores, pred_rating))
    assert result_scores.shape == (n, 1 + neg_objs.shape[1])
    assert pred_rating.shape == (n, RATING_HID)
    print("KERNEL_OK")
</pallas_src>

<mosaic_0001>
module attributes {stable_mosaic.version = 11 : i64} {
  func.func @rating_mlp_kernel(%arg0: memref<8x128xbf16, #tpu.memory_space<vmem>>, %arg1: memref<128x256xbf16, #tpu.memory_space<vmem>>, %arg2: memref<1x256xf32, #tpu.memory_space<vmem>>, %arg3: memref<256x256xbf16, #tpu.memory_space<vmem>>, %arg4: memref<1x256xf32, #tpu.memory_space<vmem>>, %arg5: memref<256x256xbf16, #tpu.memory_space<vmem>>, %arg6: memref<1x256xf32, #tpu.memory_space<vmem>>, %arg7: memref<8x256xf32, #tpu.memory_space<vmem>>) attributes {dimension_semantics = [], scalar_prefetch = 0 : i64, scratch_operands = 0 : i64, tpu.core_type = #tpu.core_type<tc>} {
    %c0 = arith.constant 0 : index
    %c0_0 = arith.constant 0 : index
    %0 = vector.load %arg0[%c0, %c0_0] : memref<8x128xbf16, #tpu.memory_space<vmem>>, vector<8x128xbf16>
    %c0_1 = arith.constant 0 : index
    %c0_2 = arith.constant 0 : index
    %1 = vector.load %arg1[%c0_1, %c0_2] : memref<128x256xbf16, #tpu.memory_space<vmem>>, vector<128x256xbf16>
    %cst = arith.constant dense<0.000000e+00> : vector<8x256xf32>
    %2 = tpu.matmul %0, %1, %cst {dimension_numbers = #tpu.dot_dimension_numbers<[1], [0], [0], [1], [0, 0, 1, 1], [], []>} : vector<8x128xbf16>, vector<128x256xbf16>, vector<8x256xf32> -> vector<8x256xf32>
    %c0_3 = arith.constant 0 : index
    %c0_4 = arith.constant 0 : index
    %3 = vector.load %arg2[%c0_3, %c0_4] : memref<1x256xf32, #tpu.memory_space<vmem>>, vector<1x256xf32>
    %4 = vector.broadcast %3 : vector<1x256xf32> to vector<8x256xf32>
    %5 = arith.addf %2, %4 : vector<8x256xf32>
    %cst_5 = arith.constant 0.000000e+00 : f32
    %6 = vector.broadcast %cst_5 : f32 to vector<8x256xf32>
    %7 = arith.maximumf %5, %6 : vector<8x256xf32>
    %8 = arith.truncf %7 : vector<8x256xf32> to vector<8x256xbf16>
    %c0_6 = arith.constant 0 : index
    %c0_7 = arith.constant 0 : index
    %9 = vector.load %arg3[%c0_6, %c0_7] : memref<256x256xbf16, #tpu.memory_space<vmem>>, vector<256x256xbf16>
    %cst_8 = arith.constant dense<0.000000e+00> : vector<8x256xf32>
    %10 = tpu.matmul %8, %9, %cst_8 {dimension_numbers = #tpu.dot_dimension_numbers<[1], [0], [0], [1], [0, 0, 1, 1], [], []>} : vector<8x256xbf16>, vector<256x256xbf16>, vector<8x256xf32> -> vector<8x256xf32>
    %c0_9 = arith.constant 0 : index
    %c0_10 = arith.constant 0 : index
    %11 = vector.load %arg4[%c0_9, %c0_10] : memref<1x256xf32, #tpu.memory_space<vmem>>, vector<1x256xf32>
    %12 = vector.broadcast %11 : vector<1x256xf32> to vector<8x256xf32>
    %13 = arith.addf %10, %12 : vector<8x256xf32>
    %cst_11 = arith.constant 0.000000e+00 : f32
    %14 = vector.broadcast %cst_11 : f32 to vector<8x256xf32>
    %15 = arith.maximumf %13, %14 : vector<8x256xf32>
    %16 = arith.truncf %15 : vector<8x256xf32> to vector<8x256xbf16>
    %c0_12 = arith.constant 0 : index
    %c0_13 = arith.constant 0 : index
    %17 = vector.load %arg5[%c0_12, %c0_13] : memref<256x256xbf16, #tpu.memory_space<vmem>>, vector<256x256xbf16>
    %cst_14 = arith.constant dense<0.000000e+00> : vector<8x256xf32>
    %18 = tpu.matmul %16, %17, %cst_14 {dimension_numbers = #tpu.dot_dimension_numbers<[1], [0], [0], [1], [0, 0, 1, 1], [], []>} : vector<8x256xbf16>, vector<256x256xbf16>, vector<8x256xf32> -> vector<8x256xf32>
    %c0_15 = arith.constant 0 : index
    %c0_16 = arith.constant 0 : index
    %19 = vector.load %arg6[%c0_15, %c0_16] : memref<1x256xf32, #tpu.memory_space<vmem>>, vector<1x256xf32>
    %20 = vector.broadcast %19 : vector<1x256xf32> to vector<8x256xf32>
    %21 = arith.addf %18, %20 : vector<8x256xf32>
    %c0_17 = arith.constant 0 : index
    %c0_18 = arith.constant 0 : index
    %22 = vector.load %arg7[%c0_17, %c0_18] : memref<8x256xf32, #tpu.memory_space<vmem>>, vector<8x256xf32>
    tpu.vector_store %arg7[%c0_17, %c0_18], %21 {strides = array<i32>} : memref<8x256xf32, #tpu.memory_space<vmem>>, vector<8x256xf32>,
    return
  }
}

</mosaic_0001>

<llo_original>
// kernel: tpu_custom_call.1
$region0: #{tpu_custom_call.1}
  #allocation0 [shape = 'u32[]', space=smem, size = 0x4, offset = 0x4, fixed_abs, tag = 'smem constant byte address 0x4 - core index']
  #allocation1 [shape = 'u32[144,128]{1,0:T(1,128)}', space=vmem, size = 0x12000, scoped, tag = 'internal scratch']
  %s0 = inlined_call_operand.hbm [shape: bf16[8,128], index: 0, kind: input, shape index: {}]
  %s1 = inlined_call_operand.hbm [shape: bf16[128,256], index: 1, kind: input, shape index: {}]
  %s2 = inlined_call_operand.vmem [shape: f32[1,256], index: 2, kind: input, shape index: {}]
  %s3 = inlined_call_operand.hbm [shape: bf16[256,256], index: 3, kind: input, shape index: {}]
  %s4 = inlined_call_operand.vmem [shape: f32[1,256], index: 4, kind: input, shape index: {}]
  %s5 = inlined_call_operand.hbm [shape: bf16[256,256], index: 5, kind: input, shape index: {}]
  %s6 = inlined_call_operand.vmem [shape: f32[1,256], index: 6, kind: input, shape index: {}]
  %s7 = inlined_call_operand.hbm [shape: f32[8,256], index: 7, kind: output, shape index: {}]
  %s8 = sld [smem:[#allocation0]]
  $region54: #{tpu_custom_call.1} parent=0
    _
  %s10 = ssub.s32 1, %s8
  %s11 = scalar_select 0, %s10, %s8
  $region1: #{tpu_custom_call.1} parent=0
    #allocation2 [shape = 'u8[2048]{0}', space=vmem, size = 0x800, scoped, tag = 'input window, operand 0, single buffered']
    #allocation3 [shape = 's32[1]{0}', space=sflag, size = 0x4, scoped, tag = 'scoped memory for tpu_custom_call.1']
    #allocation4 [shape = 's32[1]{0}', space=sflag, size = 0x4, scoped, tag = 'scoped memory for tpu_custom_call.1']
    #allocation5 [shape = 'u8[65536]{0}', space=vmem, size = 0x10000, scoped, tag = 'input window, operand 1, single buffered']
    #allocation6 [shape = 's32[1]{0}', space=sflag, size = 0x4, scoped, tag = 'scoped memory for tpu_custom_call.1']
    #allocation7 [shape = 'u8[131072]{0}', space=vmem, size = 0x20000, scoped, tag = 'input window, operand 3, single buffered']
    #allocation8 [shape = 'u8[131072]{0}', space=vmem, size = 0x20000, scoped, tag = 'input window, operand 5, single buffered']
    #allocation9 [shape = 's32[1]{0}', space=sflag, size = 0x4, scoped, tag = 'scoped memory for tpu_custom_call.1']
    #allocation10 [shape = 'u8[8192]{0}', space=vmem, size = 0x2000, scoped, tag = 'output window, operand 0, single buffered']
    %12 = vsyncpa [#allocation3], 0
    %13 = vsyncpa [#allocation6], 0
    %14 = vsyncpa [#allocation9], 0
    %15 = vsyncpa [#allocation4], 0
    // Predicated region
    $region2: #{tpu_custom_call.1} parent=1 // pred_check
      _
    $region3: #{tpu_custom_call.1} parent=1 // pred_check_branch
      %17 = sbr.rel (0) target = $region5
    $region4: #{tpu_custom_call.1} parent=1 // pred_region
      %s19 = ssub.s32 64, 64
      %20 = vsyncadd [#allocation3], %s19
      %s22 = sshll.u32 [#allocation2], 4
      %s23 = int_to_ptr.vmem [resolvable:$true] %s22
      %25 = dma.hbm_to_vmem [thread:$0]  %s0, 64, %s23, [#allocation3]
    $region5: #{tpu_custom_call.1} parent=1 // pred_fallthru
      _
    // Predicated region
    $region6: #{tpu_custom_call.1} parent=1 // pred_check
      _
    $region7: #{tpu_custom_call.1} parent=1 // pred_check_branch
      %27 = sbr.rel (0) target = $region9
    $region8: #{tpu_custom_call.1} parent=1 // pred_region
      %s29 = ssub.s32 2048, 2048
      %30 = vsyncadd [#allocation6], %s29
      %s31 = sshll.u32 [#allocation5], 4
      %s32 = int_to_ptr.vmem [resolvable:$true] %s31
      %37 = dma.hbm_to_vmem [thread:$0]  %s1, 2048, %s32, [#allocation6], 128, 128, 8
    $region9: #{tpu_custom_call.1} parent=1 // pred_fallthru
      _
    // Predicated region
    $region10: #{tpu_custom_call.1} parent=1 // pred_check
      _
    $region11: #{tpu_custom_call.1} parent=1 // pred_check_branch
      %39 = sbr.rel (0) target = $region13
    $region12: #{tpu_custom_call.1} parent=1 // pred_region
      _
    $region13: #{tpu_custom_call.1} parent=1 // pred_fallthru
      _
    // Predicated region
    $region14: #{tpu_custom_call.1} parent=1 // pred_check
      _
    $region15: #{tpu_custom_call.1} parent=1 // pred_check_branch
      %41 = sbr.rel (0) target = $region17
    $region16: #{tpu_custom_call.1} parent=1 // pred_region
      %s43 = ssub.s32 4096, 4096
      %44 = vsyncadd [#allocation6], %s43
      %s45 = sshll.u32 [#allocation7], 4
      %s46 = int_to_ptr.vmem [resolvable:$true] %s45
      %51 = dma.hbm_to_vmem [thread:$0]  %s3, 4096, %s46, [#allocation6], 128, 128, 8
    $region17: #{tpu_custom_call.1} parent=1 // pred_fallthru
      _
    // Predicated region
    $region18: #{tpu_custom_call.1} parent=1 // pred_check
      _
    $region19: #{tpu_custom_call.1} parent=1 // pred_check_branch
      %53 = sbr.rel (0) target = $region21
    $region20: #{tpu_custom_call.1} parent=1 // pred_region
      _
    $region21: #{tpu_custom_call.1} parent=1 // pred_fallthru
      _
    // Predicated region
    $region22: #{tpu_custom_call.1} parent=1 // pred_check
      _
    $region23: #{tpu_custom_call.1} parent=1 // pred_check_branch
      %55 = sbr.rel (0) target = $region25
    $region24: #{tpu_custom_call.1} parent=1 // pred_region
      %s57 = ssub.s32 4096, 4096
      %58 = vsyncadd [#allocation9], %s57
      %s59 = sshll.u32 [#allocation8], 4
      %s60 = int_to_ptr.vmem [resolvable:$true] %s59
      %65 = dma.hbm_to_vmem [thread:$0]  %s5, 4096, %s60, [#allocation9], 128, 128, 8
    $region25: #{tpu_custom_call.1} parent=1 // pred_fallthru
      _
    // Predicated region
    $region26: #{tpu_custom_call.1} parent=1 // pred_check
      _
    $region27: #{tpu_custom_call.1} parent=1 // pred_check_branch
      %67 = sbr.rel (0) target = $region29
    $region28: #{tpu_custom_call.1} parent=1 // pred_region
      _
    $region29: #{tpu_custom_call.1} parent=1 // pred_fallthru
      _
    // Predicated region
    $region30: #{tpu_custom_call.1} parent=1 // pred_check
      _
    $region31: #{tpu_custom_call.1} parent=1 // pred_check_branch
      %69 = sbr.rel (0) target = $region33
    $region32: #{tpu_custom_call.1} parent=1 // pred_region
      %70 = dma.done [#allocation3], 64
    $region33: #{tpu_custom_call.1} parent=1 // pred_fallthru
      _
    // Predicated region
    $region34: #{tpu_custom_call.1} parent=1 // pred_check
      _
    $region35: #{tpu_custom_call.1} parent=1 // pred_check_branch
      %72 = sbr.rel (0) target = $region37
    $region36: #{tpu_custom_call.1} parent=1 // pred_region
      %73 = dma.done [#allocation6], 2048
    $region37: #{tpu_custom_call.1} parent=1 // pred_fallthru
      _
    // Predicated region
    $region38: #{tpu_custom_call.1} parent=1 // pred_check
      _
    $region39: #{tpu_custom_call.1} parent=1 // pred_check_branch
      %75 = sbr.rel (0) target = $region41
    $region40: #{tpu_custom_call.1} parent=1 // pred_region
      %76 = dma.done [#allocation6], 4096
    $region41: #{tpu_custom_call.1} parent=1 // pred_fallthru
      _
    // Predicated region
    $region42: #{tpu_custom_call.1} parent=1 // pred_check
      _
    $region43: #{tpu_custom_call.1} parent=1 // pred_check_branch
      %78 = sbr.rel (0) target = $region45
    $region44: #{tpu_custom_call.1} parent=1 // pred_region
      %79 = dma.done [#allocation9], 4096
    $region45: #{tpu_custom_call.1} parent=1 // pred_fallthru
      _
    %v81 = vld [vmem:[#allocation2] sm:$0xf]
    %v82 = vld [vmem:[#allocation5] sm:$0xff]
    %v83 = vld [vmem:[#allocation5 + $0x8] sm:$0xff]
    %v84 = vld [vmem:[#allocation5 + $0x10] sm:$0xff]
    %v85 = vld [vmem:[#allocation5 + $0x18] sm:$0xff]
    %v86 = vld [vmem:[#allocation5 + $0x20] sm:$0xff]
    %v87 = vld [vmem:[#allocation5 + $0x28] sm:$0xff]
    %v88 = vld [vmem:[#allocation5 + $0x30] sm:$0xff]
    %v89 = vld [vmem:[#allocation5 + $0x38] sm:$0xff]
    %v90 = vld [vmem:[#allocation5 + $0x40] sm:$0xff]
    %v91 = vld [vmem:[#allocation5 + $0x48] sm:$0xff]
    %v92 = vld [vmem:[#allocation5 + $0x50] sm:$0xff]
    %v93 = vld [vmem:[#allocation5 + $0x58] sm:$0xff]
    %v94 = vld [vmem:[#allocation5 + $0x60] sm:$0xff]
    %v95 = vld [vmem:[#allocation5 + $0x68] sm:$0xff]
    %v96 = vld [vmem:[#allocation5 + $0x70] sm:$0xff]
    %v97 = vld [vmem:[#allocation5 + $0x78] sm:$0xff]
    %v98 = vld [vmem:[%s2] sm:$0x3]
    %v100 = vlaneseq
    %v101 = vshrl.u32 %v100, 7
    %v102 = vsub.s32 0, %v101
    %v103 = vrot.slane %v98, %v102
    %v104 = vlaneseq
    %v105 = vshrl.u32 %v104, 7
    %v106 = vsub.s32 1, %v105
    %v107 = vrot.slane %v98, %v106
    %v126 = vunpack.c.l.b16 %v82
    %v127 = vunpack.c.h.b16 %v82
    %v128 = vunpack.c.l.b16 %v83
    %v129 = vunpack.c.h.b16 %v83
    %v130 = vunpack.c.l.b16 %v84
    %v131 = vunpack.c.h.b16 %v84
    %v132 = vunpack.c.l.b16 %v85
    %v133 = vunpack.c.h.b16 %v85
    %v134 = vunpack.c.l.b16 %v86
    %v135 = vunpack.c.h.b16 %v86
    %v136 = vunpack.c.l.b16 %v87
    %v137 = vunpack.c.h.b16 %v87
    %v138 = vunpack.c.l.b16 %v88
    %v139 = vunpack.c.h.b16 %v88
    %v140 = vunpack.c.l.b16 %v89
    %v141 = vunpack.c.h.b16 %v89
    %v142 = vunpack.c.l.b16 %v90
    %v143 = vunpack.c.h.b16 %v90
    %v144 = vunpack.c.l.b16 %v91
    %v145 = vunpack.c.h.b16 %v91
    %v146 = vunpack.c.l.b16 %v92
    %v147 = vunpack.c.h.b16 %v92
    %v148 = vunpack.c.l.b16 %v93
    %v149 = vunpack.c.h.b16 %v93
    %v150 = vunpack.c.l.b16 %v94
    %v151 = vunpack.c.h.b16 %v94
    %v152 = vunpack.c.l.b16 %v95
    %v153 = vunpack.c.h.b16 %v95
    %v154 = vunpack.c.l.b16 %v96
    %v155 = vunpack.c.h.b16 %v96
    %v156 = vunpack.c.l.b16 %v97
    %v157 = vunpack.c.h.b16 %v97
    %v158 = vpack.c.b16 %v128, %v126
    %v159 = vpack.c.b16 %v129, %v127
    %v160 = vpack.c.b16 %v132, %v130
    %v161 = vpack.c.b16 %v133, %v131
    %v162 = vpack.c.b16 %v136, %v134
    %v163 = vpack.c.b16 %v137, %v135
    %v164 = vpack.c.b16 %v140, %v138
    %v165 = vpack.c.b16 %v141, %v139
    %v166 = vpack.c.b16 %v144, %v142
    %v167 = vpack.c.b16 %v145, %v143
    %v168 = vpack.c.b16 %v148, %v146
    %v169 = vpack.c.b16 %v149, %v147
    %v170 = vpack.c.b16 %v152, %v150
    %v171 = vpack.c.b16 %v153, %v151
    %v172 = vpack.c.b16 %v156, %v154
    %v173 = vpack.c.b16 %v157, %v155
    %190 = vmatprep.subr.bf16.mxu0 %v173
    %191 = vmatpush1.bf16.msra.mxu0 %v172
    %192 = vmatprep.subr.bf16.mxu0 %v171
    %193 = vmatpush1.bf16.msra.mxu0 %v170
    %194 = vmatprep.subr.bf16.mxu0 %v169
    %195 = vmatpush1.bf16.msra.mxu0 %v168
    %196 = vmatprep.subr.bf16.mxu0 %v167
    %197 = vmatpush1.bf16.msra.mxu0 %v166
    %198 = vmatprep.subr.bf16.mxu0 %v165
    %199 = vmatpush1.bf16.msra.mxu0 %v164
    %200 = vmatprep.subr.bf16.mxu0 %v163
    %201 = vmatpush1.bf16.msra.mxu0 %v162
    %202 = vmatprep.subr.bf16.mxu0 %v161
    %203 = vmatpush1.bf16.msra.mxu0 %v160
    %204 = vmatprep.subr.bf16.mxu0 %v159
    %205 = vmatpush1.bf16.msra.mxu0 %v158
    %206 = vmatprep.subr.bf16.mxu0 0
    %207 = vmatpush2.bf16.msra.mxu0 0
    %208 = vmatprep.subr.bf16.mxu0 0
    %209 = vmatpush2.bf16.msra.mxu0 0
    %210 = vmatprep.subr.bf16.mxu0 0
    %211 = vmatpush2.bf16.msra.mxu0 0
    %212 = vmatprep.subr.bf16.mxu0 0
    %213 = vmatpush2.bf16.msra.mxu0 0
    %214 = vmatprep.subr.bf16.mxu0 0
    %215 = vmatpush2.bf16.msra.mxu0 0
    %216 = vmatprep.subr.bf16.mxu0 0
    %217 = vmatpush2.bf16.msra.mxu0 0
    %218 = vmatprep.subr.bf16.mxu0 0
    %219 = vmatpush2.bf16.msra.mxu0 0
    %220 = vmatprep.subr.bf16.mxu0 0
    %221 = vmatpush2.bf16.msra.mxu0 0
    %222 = vmatprep.mubr.bf16.mxu0 0
    %223 = vmatmul.mubr.bf16.gmra.mxu0 %v81
    %v224 = vpop.f32.mrf.mxu0
    %v225 = vadd.f32 %v103, %v224
    %v226 = vpop.f32.mrf.mxu0
    %v227 = vadd.f32 %v107, %v226
    %v228 = vpop.f32.mrf.mxu0
    %v229 = vpop.f32.mrf.mxu0
    %230 = vdwg.mxu0
    %v231 = vmax.f32 %v225, 0.0
    %v232 = vmax.f32 %v227, 0.0
    %v233 = vpack.c.bf16 %v231, %v231
    %v234 = vpack.c.bf16 %v232, %v232
    %v235 = vld [vmem:[#allocation7] sm:$0xff]
    %v236 = vld [vmem:[#allocation7 + $0x8] sm:$0xff]
    %v237 = vld [vmem:[#allocation7 + $0x10] sm:$0xff]
    %v238 = vld [vmem:[#allocation7 + $0x18] sm:$0xff]
    %v239 = vld [vmem:[#allocation7 + $0x20] sm:$0xff]
    %v240 = vld [vmem:[#allocation7 + $0x28] sm:$0xff]
    %v241 = vld [vmem:[#allocation7 + $0x30] sm:$0xff]
    %v242 = vld [vmem:[#allocation7 + $0x38] sm:$0xff]
    %v243 = vld [vmem:[#allocation7 + $0x40] sm:$0xff]
    %v244 = vld [vmem:[#allocation7 + $0x48] sm:$0xff]
    %v245 = vld [vmem:[#allocation7 + $0x50] sm:$0xff]
    %v246 = vld [vmem:[#allocation7 + $0x58] sm:$0xff]
    %v247 = vld [vmem:[#allocation7 + $0x60] sm:$0xff]
    %v248 = vld [vmem:[#allocation7 + $0x68] sm:$0xff]
    %v249 = vld [vmem:[#allocation7 + $0x70] sm:$0xff]
    %v250 = vld [vmem:[#allocation7 + $0x78] sm:$0xff]
    %v251 = vld [vmem:[#allocation7 + $0x80] sm:$0xff]
    %v252 = vld [vmem:[#allocation7 + $0x88] sm:$0xff]
    %v253 = vld [vmem:[#allocation7 + $0x90] sm:$0xff]
    %v254 = vld [vmem:[#allocation7 + $0x98] sm:$0xff]
    %v255 = vld [vmem:[#allocation7 + $0xa0] sm:$0xff]
    %v256 = vld [vmem:[#allocation7 + $0xa8] sm:$0xff]
    %v257 = vld [vmem:[#allocation7 + $0xb0] sm:$0xff]
    %v258 = vld [vmem:[#allocation7 + $0xb8] sm:$0xff]
    %v259 = vld [vmem:[#allocation7 + $0xc0] sm:$0xff]
    %v260 = vld [vmem:[#allocation7 + $0xc8] sm:$0xff]
    %v261 = vld [vmem:[#allocation7 + $0xd0] sm:$0xff]
    %v262 = vld [vmem:[#allocation7 + $0xd8] sm:$0xff]
    %v263 = vld [vmem:[#allocation7 + $0xe0] sm:$0xff]
    %v264 = vld [vmem:[#allocation7 + $0xe8] sm:$0xff]
    %v265 = vld [vmem:[#allocation7 + $0xf0] sm:$0xff]
    %v266 = vld [vmem:[#allocation7 + $0xf8] sm:$0xff]
    %v267 = vld [vmem:[%s4] sm:$0x3]
    %v269 = vlaneseq
    %v270 = vshrl.u32 %v269, 7
    %v271 = vsub.s32 0, %v270
    %v272 = vrot.slane %v267, %v271
    %v273 = vlaneseq
    %v274 = vshrl.u32 %v273, 7
    %v275 = vsub.s32 1, %v274
    %v276 = vrot.slane %v267, %v275
    %v311 = vunpack.c.l.b16 %v235
    %v312 = vunpack.c.h.b16 %v235
    %v313 = vunpack.c.l.b16 %v236
    %v314 = vunpack.c.h.b16 %v236
    %v315 = vunpack.c.l.b16 %v237
    %v316 = vunpack.c.h.b16 %v237
    %v317 = vunpack.c.l.b16 %v238
    %v318 = vunpack.c.h.b16 %v238
    %v319 = vunpack.c.l.b16 %v239
    %v320 = vunpack.c.h.b16 %v239
    %v321 = vunpack.c.l.b16 %v240
    %v322 = vunpack.c.h.b16 %v240
    %v323 = vunpack.c.l.b16 %v241
    %v324 = vunpack.c.h.b16 %v241
    %v325 = vunpack.c.l.b16 %v242
    %v326 = vunpack.c.h.b16 %v242
    %v327 = vunpack.c.l.b16 %v243
    %v328 = vunpack.c.h.b16 %v243
    %v329 = vunpack.c.l.b16 %v244
    %v330 = vunpack.c.h.b16 %v244
    %v331 = vunpack.c.l.b16 %v245
    %v332 = vunpack.c.h.b16 %v245
    %v333 = vunpack.c.l.b16 %v246
    %v334 = vunpack.c.h.b16 %v246
    %v335 = vunpack.c.l.b16 %v247
    %v336 = vunpack.c.h.b16 %v247
    %v337 = vunpack.c.l.b16 %v248
    %v338 = vunpack.c.h.b16 %v248
    %v339 = vunpack.c.l.b16 %v249
    %v340 = vunpack.c.h.b16 %v249
    %v341 = vunpack.c.l.b16 %v250
    %v342 = vunpack.c.h.b16 %v250
    %v343 = vunpack.c.l.b16 %v251
    %v344 = vunpack.c.h.b16 %v251
    %v345 = vunpack.c.l.b16 %v252
    %v346 = vunpack.c.h.b16 %v252
    %v347 = vunpack.c.l.b16 %v253
    %v348 = vunpack.c.h.b16 %v253
    %v349 = vunpack.c.l.b16 %v254
    %v350 = vunpack.c.h.b16 %v254
    %v351 = vunpack.c.l.b16 %v255
    %v352 = vunpack.c.h.b16 %v255
    %v353 = vunpack.c.l.b16 %v256
    %v354 = vunpack.c.h.b16 %v256
    %v355 = vunpack.c.l.b16 %v257
    %v356 = vunpack.c.h.b16 %v257
    %v357 = vunpack.c.l.b16 %v258
    %v358 = vunpack.c.h.b16 %v258
    %v359 = vunpack.c.l.b16 %v259
    %v360 = vunpack.c.h.b16 %v259
    %v361 = vunpack.c.l.b16 %v260
    %v362 = vunpack.c.h.b16 %v260
    %v363 = vunpack.c.l.b16 %v261
    %v364 = vunpack.c.h.b16 %v261
    %v365 = vunpack.c.l.b16 %v262
    %v366 = vunpack.c.h.b16 %v262
    %v367 = vunpack.c.l.b16 %v263
    %v368 = vunpack.c.h.b16 %v263
    %v369 = vunpack.c.l.b16 %v264
    %v370 = vunpack.c.h.b16 %v264
    %v371 = vunpack.c.l.b16 %v265
    %v372 = vunpack.c.h.b16 %v265
    %v373 = vunpack.c.l.b16 %v266
    %v374 = vunpack.c.h.b16 %v266
    %v375 = vpack.c.b16 %v313, %v311
    %v376 = vpack.c.b16 %v314, %v312
    %v377 = vpack.c.b16 %v317, %v315
    %v378 = vpack.c.b16 %v318, %v316
    %v379 = vpack.c.b16 %v321, %v319
    %v380 = vpack.c.b16 %v322, %v320
    %v381 = vpack.c.b16 %v325, %v323
    %v382 = vpack.c.b16 %v326, %v324
    %v383 = vpack.c.b16 %v329, %v327
    %v384 = vpack.c.b16 %v330, %v328
    %v385 = vpack.c.b16 %v333, %v331
    %v386 = vpack.c.b16 %v334, %v332
    %v387 = vpack.c.b16 %v337, %v335
    %v388 = vpack.c.b16 %v338, %v336
    %v389 = vpack.c.b16 %v341, %v339
    %v390 = vpack.c.b16 %v342, %v340
    %v391 = vpack.c.b16 %v345, %v343
    %v392 = vpack.c.b16 %v346, %v344
    %v393 = vpack.c.b16 %v349, %v347
    %v394 = vpack.c.b16 %v350, %v348
    %v395 = vpack.c.b16 %v353, %v351
    %v396 = vpack.c.b16 %v354, %v352
    %v397 = vpack.c.b16 %v357, %v355
    %v398 = vpack.c.b16 %v358, %v356
    %v399 = vpack.c.b16 %v361, %v359
    %v400 = vpack.c.b16 %v362, %v360
    %v401 = vpack.c.b16 %v365, %v363
    %v402 = vpack.c.b16 %v366, %v364
    %v403 = vpack.c.b16 %v369, %v367
    %v404 = vpack.c.b16 %v370, %v368
    %v405 = vpack.c.b16 %v373, %v371
    %v406 = vpack.c.b16 %v374, %v372
    %439 = vmatprep.subr.bf16.mxu0 %v390
    %440 = vmatpush1.bf16.msra.mxu0 %v389
    %441 = vmatprep.subr.bf16.mxu0 %v388
    %442 = vmatpush1.bf16.msra.mxu0 %v387
    %443 = vmatprep.subr.bf16.mxu0 %v386
    %444 = vmatpush1.bf16.msra.mxu0 %v385
    %445 = vmatprep.subr.bf16.mxu0 %v384
    %446 = vmatpush1.bf16.msra.mxu0 %v383
    %447 = vmatprep.subr.bf16.mxu0 %v382
    %448 = vmatpush1.bf16.msra.mxu0 %v381
    %449 = vmatprep.subr.bf16.mxu0 %v380
    %450 = vmatpush1.bf16.msra.mxu0 %v379
    %451 = vmatprep.subr.bf16.mxu0 %v378
    %452 = vmatpush1.bf16.msra.mxu0 %v377
    %453 = vmatprep.subr.bf16.mxu0 %v376
    %454 = vmatpush1.bf16.msra.mxu0 %v375
    %455 = vmatprep.subr.bf16.mxu0 %v406
    %456 = vmatpush2.bf16.msra.mxu0 %v405
    %457 = vmatprep.subr.bf16.mxu0 %v404
    %458 = vmatpush2.bf16.msra.mxu0 %v403
    %459 = vmatprep.subr.bf16.mxu0 %v402
    %460 = vmatpush2.bf16.msra.mxu0 %v401
    %461 = vmatprep.subr.bf16.mxu0 %v400
    %462 = vmatpush2.bf16.msra.mxu0 %v399
    %463 = vmatprep.subr.bf16.mxu0 %v398
    %464 = vmatpush2.bf16.msra.mxu0 %v397
    %465 = vmatprep.subr.bf16.mxu0 %v396
    %466 = vmatpush2.bf16.msra.mxu0 %v395
    %467 = vmatprep.subr.bf16.mxu0 %v394
    %468 = vmatpush2.bf16.msra.mxu0 %v393
    %469 = vmatprep.subr.bf16.mxu0 %v392
    %470 = vmatpush2.bf16.msra.mxu0 %v391
    %471 = vmatprep.mubr.bf16.mxu0 %v234
    %472 = vmatmul.mubr.bf16.gmra.mxu0 %v233
    %v473 = vpop.f32.mrf.mxu0
    %v474 = vadd.f32 %v272, %v473
    %v475 = vpop.f32.mrf.mxu0
    %v476 = vadd.f32 %v276, %v475
    %v477 = vpop.f32.mrf.mxu0
    %v478 = vpop.f32.mrf.mxu0
    %479 = vdwg.mxu0
    %v480 = vmax.f32 %v474, 0.0
    %v481 = vmax.f32 %v476, 0.0
    %v482 = vpack.c.bf16 %v480, %v480
    %v483 = vpack.c.bf16 %v481, %v481
    %v484 = vld [vmem:[#allocation8] sm:$0xff]
    %v485 = vld [vmem:[#allocation8 + $0x8] sm:$0xff]
    %v486 = vld [vmem:[#allocation8 + $0x10] sm:$0xff]
    %v487 = vld [vmem:[#allocation8 + $0x18] sm:$0xff]
    %v488 = vld [vmem:[#allocation8 + $0x20] sm:$0xff]
    %v489 = vld [vmem:[#allocation8 + $0x28] sm:$0xff]
    %v490 = vld [vmem:[#allocation8 + $0x30] sm:$0xff]
    %v491 = vld [vmem:[#allocation8 + $0x38] sm:$0xff]
    %v492 = vld [vmem:[#allocation8 + $0x40] sm:$0xff]
    %v493 = vld [vmem:[#allocation8 + $0x48] sm:$0xff]
    %v494 = vld [vmem:[#allocation8 + $0x50] sm:$0xff]
    %v495 = vld [vmem:[#allocation8 + $0x58] sm:$0xff]
    %v496 = vld [vmem:[#allocation8 + $0x60] sm:$0xff]
    %v497 = vld [vmem:[#allocation8 + $0x68] sm:$0xff]
    %v498 = vld [vmem:[#allocation8 + $0x70] sm:$0xff]
    %v499 = vld [vmem:[#allocation8 + $0x78] sm:$0xff]
    %v500 = vld [vmem:[#allocation8 + $0x80] sm:$0xff]
    %v501 = vld [vmem:[#allocation8 + $0x88] sm:$0xff]
    %v502 = vld [vmem:[#allocation8 + $0x90] sm:$0xff]
    %v503 = vld [vmem:[#allocation8 + $0x98] sm:$0xff]
    %v504 = vld [vmem:[#allocation8 + $0xa0] sm:$0xff]
    %v505 = vld [vmem:[#allocation8 + $0xa8] sm:$0xff]
    %v506 = vld [vmem:[#allocation8 + $0xb0] sm:$0xff]
    %v507 = vld [vmem:[#allocation8 + $0xb8] sm:$0xff]
    %v508 = vld [vmem:[#allocation8 + $0xc0] sm:$0xff]
    %v509 = vld [vmem:[#allocation8 + $0xc8] sm:$0xff]
    %v510 = vld [vmem:[#allocation8 + $0xd0] sm:$0xff]
    %v511 = vld [vmem:[#allocation8 + $0xd8] sm:$0xff]
    %v512 = vld [vmem:[#allocation8 + $0xe0] sm:$0xff]
    %v513 = vld [vmem:[#allocation8 + $0xe8] sm:$0xff]
    %v514 = vld [vmem:[#allocation8 + $0xf0] sm:$0xff]
    %v515 = vld [vmem:[#allocation8 + $0xf8] sm:$0xff]
    %v516 = vld [vmem:[%s6] sm:$0x3]
    %v518 = vlaneseq
    %v519 = vshrl.u32 %v518, 7
    %v520 = vsub.s32 0, %v519
    %v521 = vrot.slane %v516, %v520
    %v522 = vlaneseq
    %v523 = vshrl.u32 %v522, 7
    %v524 = vsub.s32 1, %v523
    %v525 = vrot.slane %v516, %v524
    %v560 = vunpack.c.l.b16 %v484
    %v561 = vunpack.c.h.b16 %v484
    %v562 = vunpack.c.l.b16 %v485
    %v563 = vunpack.c.h.b16 %v485
    %v564 = vunpack.c.l.b16 %v486
    %v565 = vunpack.c.h.b16 %v486
    %v566 = vunpack.c.l.b16 %v487
    %v567 = vunpack.c.h.b16 %v487
    %v568 = vunpack.c.l.b16 %v488
    %v569 = vunpack.c.h.b16 %v488
    %v570 = vunpack.c.l.b16 %v489
    %v571 = vunpack.c.h.b16 %v489
    %v572 = vunpack.c.l.b16 %v490
    %v573 = vunpack.c.h.b16 %v490
    %v574 = vunpack.c.l.b16 %v491
    %v575 = vunpack.c.h.b16 %v491
    %v576 = vunpack.c.l.b16 %v492
    %v577 = vunpack.c.h.b16 %v492
    %v578 = vunpack.c.l.b16 %v493
    %v579 = vunpack.c.h.b16 %v493
    %v580 = vunpack.c.l.b16 %v494
    %v581 = vunpack.c.h.b16 %v494
    %v582 = vunpack.c.l.b16 %v495
    %v583 = vunpack.c.h.b16 %v495
    %v584 = vunpack.c.l.b16 %v496
    %v585 = vunpack.c.h.b16 %v496
    %v586 = vunpack.c.l.b16 %v497
    %v587 = vunpack.c.h.b16 %v497
    %v588 = vunpack.c.l.b16 %v498
    %v589 = vunpack.c.h.b16 %v498
    %v590 = vunpack.c.l.b16 %v499
    %v591 = vunpack.c.h.b16 %v499
    %v592 = vunpack.c.l.b16 %v500
    %v593 = vunpack.c.h.b16 %v500
    %v594 = vunpack.c.l.b16 %v501
    %v595 = vunpack.c.h.b16 %v501
    %v596 = vunpack.c.l.b16 %v502
    %v597 = vunpack.c.h.b16 %v502
    %v598 = vunpack.c.l.b16 %v503
    %v599 = vunpack.c.h.b16 %v503
    %v600 = vunpack.c.l.b16 %v504
    %v601 = vunpack.c.h.b16 %v504
    %v602 = vunpack.c.l.b16 %v505
    %v603 = vunpack.c.h.b16 %v505
    %v604 = vunpack.c.l.b16 %v506
    %v605 = vunpack.c.h.b16 %v506
    %v606 = vunpack.c.l.b16 %v507
    %v607 = vunpack.c.h.b16 %v507
    %v608 = vunpack.c.l.b16 %v508
    %v609 = vunpack.c.h.b16 %v508
    %v610 = vunpack.c.l.b16 %v509
    %v611 = vunpack.c.h.b16 %v509
    %v612 = vunpack.c.l.b16 %v510
    %v613 = vunpack.c.h.b16 %v510
    %v614 = vunpack.c.l.b16 %v511
    %v615 = vunpack.c.h.b16 %v511
    %v616 = vunpack.c.l.b16 %v512
    %v617 = vunpack.c.h.b16 %v512
    %v618 = vunpack.c.l.b16 %v513
    %v619 = vunpack.c.h.b16 %v513
    %v620 = vunpack.c.l.b16 %v514
    %v621 = vunpack.c.h.b16 %v514
    %v622 = vunpack.c.l.b16 %v515
    %v623 = vunpack.c.h.b16 %v515
    %v624 = vpack.c.b16 %v562, %v560
    %v625 = vpack.c.b16 %v563, %v561
    %v626 = vpack.c.b16 %v566, %v564
    %v627 = vpack.c.b16 %v567, %v565
    %v628 = vpack.c.b16 %v570, %v568
    %v629 = vpack.c.b16 %v571, %v569
    %v630 = vpack.c.b16 %v574, %v572
    %v631 = vpack.c.b16 %v575, %v573
    %v632 = vpack.c.b16 %v578, %v576
    %v633 = vpack.c.b16 %v579, %v577
    %v634 = vpack.c.b16 %v582, %v580
    %v635 = vpack.c.b16 %v583, %v581
    %v636 = vpack.c.b16 %v586, %v584
    %v637 = vpack.c.b16 %v587, %v585
    %v638 = vpack.c.b16 %v590, %v588
    %v639 = vpack.c.b16 %v591, %v589
    %v640 = vpack.c.b16 %v594, %v592
    %v641 = vpack.c.b16 %v595, %v593
    %v642 = vpack.c.b16 %v598, %v596
    %v643 = vpack.c.b16 %v599, %v597
    %v644 = vpack.c.b16 %v602, %v600
    %v645 = vpack.c.b16 %v603, %v601
    %v646 = vpack.c.b16 %v606, %v604
    %v647 = vpack.c.b16 %v607, %v605
    %v648 = vpack.c.b16 %v610, %v608
    %v649 = vpack.c.b16 %v611, %v609
    %v650 = vpack.c.b16 %v614, %v612
    %v651 = vpack.c.b16 %v615, %v613
    %v652 = vpack.c.b16 %v618, %v616
    %v653 = vpack.c.b16 %v619, %v617
    %v654 = vpack.c.b16 %v622, %v620
    %v655 = vpack.c.b16 %v623, %v621
    %688 = vmatprep.subr.bf16.mxu0 %v639
    %689 = vmatpush1.bf16.msra.mxu0 %v638
    %690 = vmatprep.subr.bf16.mxu0 %v637
    %691 = vmatpush1.bf16.msra.mxu0 %v636
    %692 = vmatprep.subr.bf16.mxu0 %v635
    %693 = vmatpush1.bf16.msra.mxu0 %v634
    %694 = vmatprep.subr.bf16.mxu0 %v633
    %695 = vmatpush1.bf16.msra.mxu0 %v632
    %696 = vmatprep.subr.bf16.mxu0 %v631
    %697 = vmatpush1.bf16.msra.mxu0 %v630
    %698 = vmatprep.subr.bf16.mxu0 %v629
    %699 = vmatpush1.bf16.msra.mxu0 %v628
    %700 = vmatprep.subr.bf16.mxu0 %v627
    %701 = vmatpush1.bf16.msra.mxu0 %v626
    %702 = vmatprep.subr.bf16.mxu0 %v625
    %703 = vmatpush1.bf16.msra.mxu0 %v624
    %704 = vmatprep.subr.bf16.mxu0 %v655
    %705 = vmatpush2.bf16.msra.mxu0 %v654
    %706 = vmatprep.subr.bf16.mxu0 %v653
    %707 = vmatpush2.bf16.msra.mxu0 %v652
    %708 = vmatprep.subr.bf16.mxu0 %v651
    %709 = vmatpush2.bf16.msra.mxu0 %v650
    %710 = vmatprep.subr.bf16.mxu0 %v649
    %711 = vmatpush2.bf16.msra.mxu0 %v648
    %712 = vmatprep.subr.bf16.mxu0 %v647
    %713 = vmatpush2.bf16.msra.mxu0 %v646
    %714 = vmatprep.subr.bf16.mxu0 %v645
    %715 = vmatpush2.bf16.msra.mxu0 %v644
    %716 = vmatprep.subr.bf16.mxu0 %v643
    %717 = vmatpush2.bf16.msra.mxu0 %v642
    %718 = vmatprep.subr.bf16.mxu0 %v641
    %719 = vmatpush2.bf16.msra.mxu0 %v640
    %720 = vmatprep.mubr.bf16.mxu0 %v483
    %721 = vmatmul.mubr.bf16.gmra.mxu0 %v482
    %v722 = vpop.f32.mrf.mxu0
    %v723 = vadd.f32 %v521, %v722
    %v724 = vpop.f32.mrf.mxu0
    %v725 = vadd.f32 %v525, %v724
    %v726 = vpop.f32.mrf.mxu0
    %v727 = vpop.f32.mrf.mxu0
    %728 = vdwg.mxu0
    %729 = vst [vmem:[#allocation10] sm:$0xff] %v723
    %730 = vst [vmem:[#allocation10 + $0x8] sm:$0xff] %v725
    // Predicated region
    $region46: #{tpu_custom_call.1} parent=1 // pred_check
      _
    $region47: #{tpu_custom_call.1} parent=1 // pred_check_branch
      %732 = sbr.rel (0) target = $region49
    $region48: #{tpu_custom_call.1} parent=1 // pred_region
      %s734 = ssub.s32 256, 256
      %735 = vsyncadd [#allocation4], %s734
      %s737 = sshll.u32 [#allocation10], 4
      %s738 = int_to_ptr.vmem [resolvable:$true] %s737
      %740 = dma.vmem_to_hbm [thread:$0]  %s738, 256, %s7, [#allocation4]
    $region49: #{tpu_custom_call.1} parent=1 // pred_fallthru
      _
    // Predicated region
    $region50: #{tpu_custom_call.1} parent=1 // pred_check
      _
    $region51: #{tpu_custom_call.1} parent=1 // pred_check_branch
      %742 = sbr.rel (0) target = $region53
    $region52: #{tpu_custom_call.1} parent=1 // pred_region
      %743 = dma.done [#allocation4], 256
    $region53: #{tpu_custom_call.1} parent=1 // pred_fallthru
      _
    %744 = vsyncpa [#allocation3], 1
    %745 = vsyncpa [#allocation6], 1
    %746 = vsyncpa [#allocation9], 1
    %747 = vsyncpa [#allocation4], 1

</llo_original>
